<compile_context>
chip_gen: v5e
topology: v5e:2x2
jax: 0.10.0
libtpu: 0.0.40
codegen_flags: <defaults>
</compile_context>

<pallas_src>
import numpy as np
import jax
import jax.numpy as jnp
from jax.experimental import pallas as pl
from jax.experimental.pallas import tpu as pltpu

# ----------------------------- model config ---------------------------------
INPUT_CHANNEL = 32
OUTPUT_CHANNEL = 32            # C (must equal INPUT_CHANNEL for the flatten)
NUM_BINS = 8                   # Z (model_cfg.num_bins)
NUM_TBINS = 10                 # temporal bins (hard-coded 10 in HCBAM)
REDUCTION = 16
KSIZE = 7
FEAT_DIM = 4                   # per-voxel feature dim (up_dimension input_dim=4)

C = OUTPUT_CHANNEL
C_HID = C // 2                 # up_dimension hidden
C_RED = C // REDUCTION         # ChannelGate bottleneck
D_BS = C * NUM_BINS            # bin_shuffle input width (256)

# N-tile target: ~6 MiB double-buffered working set -> fits v7x's 64 MiB VMEM;
# v5e/v6e (128 MiB) could sweep this larger.
TILE_ROWS = 1024
VMEM_LIMIT_BYTES = 32 * 1024 * 1024
SP_BN_EPS = 1e-5               # SpatialGate BasicConv BatchNorm1d (default eps)
BS_BN_EPS = 1e-3               # bin_shuffle BatchNorm1d(eps=0.001) per the reference


# ------------------------------- kernels ------------------------------------
def _zbam_core(x_ref, w1_ref, b1_ref, w2_ref, b2_ref,
               cg1w_ref, cg1b_ref, cg2we_ref, cg2be_ref):
    """up_dimension MLP (block-diagonal) + ChannelGate on one (TILE, Z*4) tile.

    Returns the channel-gated features in the lane-dense z-major flattened
    layout (TILE, Z*C).
    """
    f32 = jnp.float32
    bf16 = jnp.bfloat16

    x = x_ref[...].astype(bf16)                                        # (T, Z*4)
    h = jnp.dot(x, w1_ref[...], preferred_element_type=f32) + b1_ref[...]
    h = jnp.maximum(h, 0.0)                                            # (T, Z*C/2)
    feat = jnp.dot(h.astype(bf16), w2_ref[...],
                   preferred_element_type=f32) + b2_ref[...]           # (T, Z*C)

    # ChannelGate avg/max pools over Z via static lane slices of the flat layout.
    sum_p = feat[:, 0:C]
    max_p = feat[:, 0:C]
    for z in range(1, NUM_BINS):
        fz = feat[:, z * C:(z + 1) * C]
        sum_p = sum_p + fz
        max_p = jnp.maximum(max_p, fz)
    avg_p = sum_p * (1.0 / NUM_BINS)

    cg1w = cg1w_ref[...]
    cg1b = cg1b_ref[...]
    a = (jnp.maximum(jnp.dot(avg_p, cg1w, preferred_element_type=f32) + cg1b, 0.0) +
         jnp.maximum(jnp.dot(max_p, cg1w, preferred_element_type=f32) + cg1b, 0.0))
    # Second ChannelGate layer uses Z-replicated ("expanded") weights so the
    # attention comes out already broadcast over the Z blocks: one lane-dense
    # multiply, no per-z tiling/column extraction inside the kernel.
    att = jax.nn.sigmoid(jnp.dot(a, cg2we_ref[...],
                                 preferred_element_type=f32) + cg2be_ref[...])
    return feat * att                                                  # (T, Z*C)


def _spatial_conv(gated, w_mean, w_max):
    """SpatialGate ChannelPool + Conv1d(2->1,k=7) over Z on one tile.

    The mean-channel half of the ChannelPool is folded into `w_mean`
    ((Z*C, Z) matmul on the MXU); the max-channel half is 8 lane max-reductions
    accumulated against the conv band weights (max-pool has no matmul form).
    """
    f32 = jnp.float32
    conv = jnp.dot(gated, w_mean, preferred_element_type=f32)          # (T, Z)
    for z in range(NUM_BINS):
        cmax = jnp.max(gated[:, z * C:(z + 1) * C], axis=1, keepdims=True)
        conv = conv + cmax * w_max[z:z + 1, :]
    return conv


def zbam_stats_kernel(x_ref, w1_ref, b1_ref, w2_ref, b2_ref,
                      cg1w_ref, cg1b_ref, cg2we_ref, cg2be_ref,
                      wmean_ref, wmax_ref, conv_ref):
    """Pass 1: pre-BatchNorm SpatialGate conv response (for its global BN stats)."""
    gated = _zbam_core(x_ref, w1_ref, b1_ref, w2_ref, b2_ref,
                       cg1w_ref, cg1b_ref, cg2we_ref, cg2be_ref)
    conv_ref[...] = _spatial_conv(gated, wmean_ref[...], wmax_ref[...])


def zbam_apply_kernel(x_ref, w1_ref, b1_ref, w2_ref, b2_ref,
                      cg1w_ref, cg1b_ref, cg2we_ref, cg2be_ref,
                      wmean_ref, wmax_ref, bsp_ref, rep_ref, bs1w_ref,
                      feat_ref, h1_ref):
    """Pass 2: recompute the gates, apply the BN(affine-folded)+sigmoid spatial
    scale, write the lane-dense (T, Z*C) feature and the fused first
    bin_shuffle matmul h1 = feat @ W1."""
    f32 = jnp.float32
    gated = _zbam_core(x_ref, w1_ref, b1_ref, w2_ref, b2_ref,
                       cg1w_ref, cg1b_ref, cg2we_ref, cg2be_ref)
    # conv weights arrive pre-scaled by the BN scale; bsp carries the BN shift.
    conv = _spatial_conv(gated, wmean_ref[...], wmax_ref[...]) + bsp_ref[...]
    scale = jax.nn.sigmoid(conv)                                       # (T, Z)
    # Broadcast the per-z scale over the C channels of each z block with a small
    # replication matmul (avoids per-z column extraction / relayouts).
    scale_e = jnp.dot(scale, rep_ref[...], preferred_element_type=f32)  # (T, Z*C)
    out = gated * scale_e
    feat_ref[...] = out
    h1_ref[...] = jnp.dot(out.astype(jnp.bfloat16), bs1w_ref[...],
                          preferred_element_type=f32)


def matmul_kernel(x_ref, w_ref, o_ref):
    o_ref[...] = jnp.dot(x_ref[...].astype(jnp.bfloat16), w_ref[...],
                         preferred_element_type=jnp.float32)


def bn_relu_matmul_kernel(x_ref, s_ref, t_ref, w_ref, o_ref):
    a = jnp.maximum(x_ref[...] * s_ref[...] + t_ref[...], 0.0)
    o_ref[...] = jnp.dot(a.astype(jnp.bfloat16), w_ref[...],
                         preferred_element_type=jnp.float32)


def bn_relu_kernel(x_ref, s_ref, t_ref, o_ref):
    o_ref[...] = jnp.maximum(x_ref[...] * s_ref[...] + t_ref[...], 0.0)


# ------------------------------ wrappers -------------------------------------
def _round_up(n, m):
    return ((n + m - 1) // m) * m


def _pick_tile(n, target=TILE_ROWS):
    return min(target, _round_up(max(n, 1), 8))


def _pad_rows(x, n_pad):
    n = x.shape[0]
    return x if n == n_pad else jnp.pad(x, ((0, n_pad - n), (0, 0)))


def _row_spec(tile, ncols):
    return pl.BlockSpec((tile, ncols), lambda i: (i, 0))


def _full_spec(shape):
    nd = len(shape)
    return pl.BlockSpec(tuple(shape), lambda *_: (0,) * nd)


def _cparams():
    return pltpu.CompilerParams(dimension_semantics=("parallel",),
                                vmem_limit_bytes=VMEM_LIMIT_BYTES)


def run_row_tiled(kernel, tiled_in, full_in, out_cols, tile, cost_estimate=None):
    """Row-tiled pallas_call: `tiled_in` arrays are (n_pad, .) blocked over a 1-D
    grid; `full_in` arrays (weights / BN rows) ride along as whole-array blocks."""
    n_pad = tiled_in[0].shape[0]
    grid = (n_pad // tile,)
    multi = isinstance(out_cols, (tuple, list))
    cols = tuple(out_cols) if multi else (out_cols,)
    out_shape = tuple(jax.ShapeDtypeStruct((n_pad, c), jnp.float32) for c in cols)
    out_specs = tuple(_row_spec(tile, c) for c in cols)
    return pl.pallas_call(
        kernel,
        grid=grid,
        in_specs=[_row_spec(tile, a.shape[1]) for a in tiled_in]
                 + [_full_spec(a.shape) for a in full_in],
        out_specs=out_specs if multi else out_specs[0],
        out_shape=out_shape if multi else out_shape[0],
        compiler_params=_cparams(),
        cost_estimate=cost_estimate,
    )(*tiled_in, *full_in)


def _bn_affine(x_real, gamma, beta, eps):
    """Training-mode BatchNorm (biased batch variance) folded to y = x*s + t."""
    mu = jnp.mean(x_real, axis=0, keepdims=True)
    var = jnp.mean(jnp.square(x_real - mu), axis=0, keepdims=True)
    s = gamma * jax.lax.rsqrt(var + eps)
    return s, beta - mu * s


def run_bin_shuffle(x, n_real, w1, g1, b1, w2, g2, b2, eps=BS_BN_EPS):
    """Linear(no bias) -> BN(train) -> ReLU -> Linear(no bias) -> BN(train) -> ReLU,
    tiled over rows.  Global BN statistics are reduced in glue between passes."""
    tile = _pick_tile(n_real)
    n_pad = _round_up(n_real, tile)
    x_p = _pad_rows(x, n_pad)
    h1 = run_row_tiled(matmul_kernel, [x_p], [w1], w1.shape[1], tile)
    s1, t1 = _bn_affine(h1[:n_real], g1, b1, eps)
    h2 = run_row_tiled(bn_relu_matmul_kernel, [h1], [s1, t1, w2], w2.shape[1], tile)
    s2, t2 = _bn_affine(h2[:n_real], g2, b2, eps)
    out = run_row_tiled(bn_relu_kernel, [h2], [s2, t2], h2.shape[1], tile)
    return out[:n_real]


def run_spatial_branch(x_flat, n_real, p):
    """zbam (up_dimension + ChannelGate + SpatialGate) + bin_shuffle, tiled over N."""
    f32 = jnp.float32
    tile = _pick_tile(n_real)
    n_pad = _round_up(n_real, tile)
    x_p = _pad_rows(x_flat, n_pad)

    core_w = [p['w1bd'], p['b1bd'], p['w2bd'], p['b2bd'],
              p['cg1_w'], p['cg1_b'], p['cg2_we'], p['cg2_be2']]

    # Pass 1: pre-BN SpatialGate conv response (N, Z) for its global BN stats.
    conv = run_row_tiled(zbam_stats_kernel, [x_p],
                         core_w + [p['wsp_mean'], p['wsp_max']],
                         NUM_BINS, tile)

    # BatchNorm1d(1) training mode: statistics over all real N*Z positions.
    cr = conv[:n_real]
    mu = jnp.mean(cr)
    var = jnp.mean(jnp.square(cr - mu))
    alpha = p['sp_bn_g'] * jax.lax.rsqrt(var + SP_BN_EPS)
    beta = p['sp_bn_b'] - mu * alpha
    wsp_mean_s = p['wsp_mean'] * alpha          # fold BN scale into conv weights
    wsp_max_s = p['wsp_max'] * alpha
    bsp_row = jnp.broadcast_to(beta, (1, NUM_BINS)).astype(f32)

    # Pass 2: apply spatial gate, emit lane-dense (N, Z*C) feature + fused
    # first bin_shuffle matmul.
    cost = pl.CostEstimate(
        flops=int(n_pad) * 2 * (NUM_BINS * FEAT_DIM * NUM_BINS * C_HID
                                + NUM_BINS * C_HID * D_BS
                                + D_BS * NUM_BINS + NUM_BINS * D_BS
                                + D_BS * (D_BS // 2)),
        transcendentals=int(n_pad) * (D_BS + NUM_BINS),
        bytes_accessed=int(n_pad) * 4 * (NUM_BINS * FEAT_DIM + D_BS + D_BS // 2))
    feat_flat, h1 = run_row_tiled(
        zbam_apply_kernel, [x_p],
        core_w + [wsp_mean_s, wsp_max_s, bsp_row, p['rep_zc'], p['bs1_w']],
        (D_BS, D_BS // 2), tile, cost_estimate=cost)

    # Remaining bin_shuffle: BN -> ReLU -> Linear -> BN -> ReLU (global batch stats).
    s1, t1 = _bn_affine(h1[:n_real], p['bs1_g'], p['bs1_b'], BS_BN_EPS)
    h2 = run_row_tiled(bn_relu_matmul_kernel, [h1], [s1, t1, p['bs2_w']], C, tile)
    s2, t2 = _bn_affine(h2[:n_real], p['bs2_g'], p['bs2_b'], BS_BN_EPS)
    out = run_row_tiled(bn_relu_kernel, [h2], [s2, t2], C, tile)
    return feat_flat[:n_real], out[:n_real]


# --------------------------- parameter init ----------------------------------
def init_params(key):
    """Random parameters.  PyTorch-native tensors are materialized first and then
    re-laid-out (block-diagonal / Z-replicated / row-permuted) for the kernels,
    so the composite function matches the reference module's forward exactly."""
    ks = iter(jax.random.split(key, 32))

    def W(shape, scale=0.1):
        return jax.random.normal(next(ks), shape, jnp.float32) * scale

    Z, CH = NUM_BINS, C_HID
    p = {}

    # up_dimension: Linear(4->C/2) + ReLU + Linear(C/2->C)   (stored (in, out))
    up1_w = np.asarray(W((FEAT_DIM, CH)))
    up1_b = np.asarray(W((CH,), 0.02))
    up2_w = np.asarray(W((CH, C)))
    up2_b = np.asarray(W((C,), 0.02))
    # block-diagonal forms acting on the z-major flattened (N, Z*4) layout
    w1bd = np.zeros((Z * FEAT_DIM, Z * CH), np.float32)
    w2bd = np.zeros((Z * CH, Z * C), np.float32)
    for z in range(Z):
        w1bd[z * FEAT_DIM:(z + 1) * FEAT_DIM, z * CH:(z + 1) * CH] = up1_w
        w2bd[z * CH:(z + 1) * CH, z * C:(z + 1) * C] = up2_w
    p['w1bd'] = jnp.asarray(w1bd, jnp.bfloat16)
    p['b1bd'] = jnp.asarray(np.tile(up1_b[None, :], (1, Z)).astype(np.float32))
    p['w2bd'] = jnp.asarray(w2bd, jnp.bfloat16)
    p['b2bd'] = jnp.asarray(np.tile(up2_b[None, :], (1, Z)).astype(np.float32))

    # ChannelGate MLP: Linear(C->C/16) + ReLU + Linear(C/16->C)
    cg1_w = np.asarray(W((C, C_RED)))
    cg1_b = np.asarray(W((C_RED,), 0.02))
    cg2_w = np.asarray(W((C_RED, C)))
    cg2_b = np.asarray(W((C,), 0.02))
    p['cg1_w'] = jnp.asarray(cg1_w)
    p['cg1_b'] = jnp.asarray(cg1_b[None, :])
    p['cg2_we'] = jnp.asarray(np.tile(cg2_w, (1, Z)).astype(np.float32))
    p['cg2_be2'] = jnp.asarray((2.0 * np.tile(cg2_b[None, :], (1, Z))).astype(np.float32))

    # SpatialGate Conv1d(2->1, k=7, pad=3, bias=False) as banded matrices over Z
    w_conv = np.asarray(W((1, 2, KSIZE), 0.2))
    pad = (KSIZE - 1) // 2
    A = np.zeros((2, Z, Z), np.float32)
    for cin in range(2):                      # ChannelPool: cin 0 = max, 1 = mean
        for zi in range(Z):
            for zo in range(Z):
                k = zi - zo + pad
                if 0 <= k < KSIZE:
                    A[cin, zi, zo] = w_conv[0, cin, k]
    p['wsp_max'] = jnp.asarray(A[0])                                     # (Z, Z)
    p['wsp_mean'] = jnp.asarray((np.repeat(A[1], C, axis=0) / float(C)).astype(np.float32))
    p['sp_bn_g'] = jnp.asarray(1.0, jnp.float32)
    p['sp_bn_b'] = jnp.asarray(0.05, jnp.float32)
    rep = np.zeros((Z, Z * C), np.float32)                               # (N,Z)->(N,Z*C)
    for z in range(Z):
        rep[z, z * C:(z + 1) * C] = 1.0
    p['rep_zc'] = jnp.asarray(rep)

    # bin_shuffle: Linear(C*Z -> C*Z/2, no bias) + BN + ReLU + Linear(-> C) + BN + ReLU
    bs1_w_pt = np.asarray(W((D_BS, D_BS // 2), 0.05))   # PyTorch rows are c*Z+z (C-major flatten)
    perm = np.asarray([c * Z + z for z in range(Z) for c in range(C)], np.int32)
    p['bs1_w'] = jnp.asarray(bs1_w_pt[perm], jnp.bfloat16)   # kernel rows are z*C+c
    p['bs1_g'] = 1.0 + W((1, D_BS // 2), 0.01)
    p['bs1_b'] = W((1, D_BS // 2), 0.02)
    p['bs2_w'] = W((D_BS // 2, C), 0.05).astype(jnp.bfloat16)
    p['bs2_g'] = 1.0 + W((1, C), 0.01)
    p['bs2_b'] = W((1, C), 0.02)

    # bin_shuffle_t: 4*10 -> 20 -> C
    Dt = FEAT_DIM * NUM_TBINS
    p['bst1_w'] = W((Dt, Dt // 2), 0.1).astype(jnp.bfloat16)
    p['bst1_g'] = 1.0 + W((1, Dt // 2), 0.01)
    p['bst1_b'] = W((1, Dt // 2), 0.02)
    p['bst2_w'] = W((Dt // 2, C), 0.1).astype(jnp.bfloat16)
    p['bst2_g'] = 1.0 + W((1, C), 0.01)
    p['bst2_b'] = W((1, C), 0.02)
    return p


# ------------------------------ forward (glue + kernels) ---------------------
# TODO(synk): scatter-based binning and boolean-mask compaction are data-dependent
# shape ops; they stay in NumPy/host glue (no clean static-shape Pallas form).
def binning(voxels, coords, num_unq, unq_inv, unq_cnt, nbins):
    voxels = np.asarray(voxels)
    coords = np.asarray(coords)
    unq_inv = np.asarray(unq_inv)
    unq_cnt = np.asarray(unq_cnt)
    src = np.zeros((num_unq, nbins, voxels.shape[1] + 1), np.float32)
    src[:, :, 0] = -1.0
    src[unq_inv, coords[:, 1], 1:] = voxels
    src[unq_inv, coords[:, 1], 0] = coords[:, 0].astype(np.float32)
    occupied_mask = unq_cnt >= 2
    return src, occupied_mask


def hcbam_forward(data, params):
    src, occ = binning(data['voxel_features'], data['voxel_features_coords'],
                       int(data['v_feat_unq_coords'].shape[0]),
                       data['v_feat_unq_inv'], data['v_feat_unq_cnt'], NUM_BINS)
    src_t, occ_t = binning(data['toxel_features'], data['toxel_features_coords'],
                           int(data['t_feat_unq_coords'].shape[0]),
                           data['t_feat_unq_inv'], data['t_feat_unq_cnt'], NUM_TBINS)

    # --- spatial (z-bin) branch ---
    src = src[np.nonzero(occ)[0]]                              # (N, Z, 5)
    mlp_bxyz = src[:, :, :4]
    n = src.shape[0]
    # z-major flatten (N, Z*4) -- what the block-diagonal MLP weights expect
    x_flat = jnp.asarray(src[:, :, 1:].reshape(n, NUM_BINS * FEAT_DIM))

    feat_flat, out = run_spatial_branch(x_flat, n, params)
    mlp_feat = feat_flat.reshape(n, NUM_BINS, C)               # == torch mlp_feat

    # --- temporal (t-bin) branch ---
    src_t = src_t[np.nonzero(occ_t)[0]]                        # (Nt, 10, 5)
    mlp_bxyt = src_t[:, :, :4]
    nt = src_t.shape[0]
    xt = src_t[:, :, 1:]
    xt_flat = jnp.asarray(xt.reshape(nt, NUM_TBINS * FEAT_DIM))
    out_t = run_bin_shuffle(xt_flat, nt,
                            params['bst1_w'], params['bst1_g'], params['bst1_b'],
                            params['bst2_w'], params['bst2_g'], params['bst2_b'])

    aux = {'mlp_bxyz': mlp_bxyz, 'mlp_feat': mlp_feat,
           'mlp_bxyt': mlp_bxyt, 'mlp_feat_t': xt}
    return out, occ, out_t, occ_t, aux


# ------------------------------ synthetic data --------------------------------
def make_data(key):
    kv, kt = jax.random.split(key)

    # z-bin stream: 12 pillars, 3 voxels each except the last (1 voxel -> masked out)
    U = 12
    inv, bins = [], []
    for u in range(U):
        nb = 1 if u == U - 1 else 3
        for off in [0, 2, 5][:nb]:
            inv.append(u)
            bins.append((u + off) % NUM_BINS)
    inv = np.asarray(inv, np.int32)
    bins = np.asarray(bins, np.int32)
    coords = np.stack([inv % 2, bins], axis=1).astype(np.int32)
    voxels = np.asarray(jax.random.normal(kv, (inv.shape[0], FEAT_DIM), jnp.float32))
    cnt = np.bincount(inv, minlength=U).astype(np.int32)

    # t-bin stream: 9 pillars, 3 toxels each except the last (1 toxel -> masked out)
    Ut = 9
    inv_t, bins_t = [], []
    for u in range(Ut):
        nb = 1 if u == Ut - 1 else 3
        for off in [0, 3, 7][:nb]:
            inv_t.append(u)
            bins_t.append((u + off) % NUM_TBINS)
    inv_t = np.asarray(inv_t, np.int32)
    bins_t = np.asarray(bins_t, np.int32)
    coords_t = np.stack([inv_t % 2, bins_t], axis=1).astype(np.int32)
    toxels = np.asarray(jax.random.normal(kt, (inv_t.shape[0], FEAT_DIM), jnp.float32))
    cnt_t = np.bincount(inv_t, minlength=Ut).astype(np.int32)

    return {
        'voxel_features': voxels,
        'voxel_features_coords': coords,
        'v_feat_unq_coords': np.arange(U, dtype=np.int32),
        'v_feat_unq_inv': inv,
        'v_feat_unq_cnt': cnt,
        'toxel_features': toxels,
        'toxel_features_coords': coords_t,
        't_feat_unq_coords': np.arange(Ut, dtype=np.int32),
        't_feat_unq_inv': inv_t,
        't_feat_unq_cnt': cnt_t,
    }


if __name__ == "__main__":
    key = jax.random.PRNGKey(0)
    k_param, k_data = jax.random.split(key)
    params = init_params(k_param)
    data = make_data(k_data)

    out, occ, out_t, occ_t, aux = hcbam_forward(data, params)
    jax.block_until_ready((out, out_t, aux['mlp_feat']))

    n_occ = int(np.asarray(occ).sum())
    n_occ_t = int(np.asarray(occ_t).sum())
    assert out.shape == (n_occ, C)
    assert out_t.shape == (n_occ_t, C)
    assert aux['mlp_feat'].shape == (n_occ, NUM_BINS, C)
    assert aux['mlp_bxyz'].shape == (n_occ, NUM_BINS, 4)
    assert aux['mlp_feat_t'].shape == (n_occ_t, NUM_TBINS, FEAT_DIM)
    assert bool(jnp.all(jnp.isfinite(out))) and bool(jnp.all(jnp.isfinite(out_t)))
    print("KERNEL_OK")
</pallas_src>

<mosaic_0001>
module attributes {stable_mosaic.version = 11 : i64} {
  func.func @zbam_stats_kernel(%arg0: i32, %arg1: memref<16x32xf32, #tpu.memory_space<vmem>>, %arg2: memref<32x128xbf16, #tpu.memory_space<vmem>>, %arg3: memref<1x128xf32, #tpu.memory_space<vmem>>, %arg4: memref<128x256xbf16, #tpu.memory_space<vmem>>, %arg5: memref<1x256xf32, #tpu.memory_space<vmem>>, %arg6: memref<32x2xf32, #tpu.memory_space<vmem>>, %arg7: memref<1x2xf32, #tpu.memory_space<vmem>>, %arg8: memref<2x256xf32, #tpu.memory_space<vmem>>, %arg9: memref<1x256xf32, #tpu.memory_space<vmem>>, %arg10: memref<256x8xf32, #tpu.memory_space<vmem>>, %arg11: memref<8x8xf32, #tpu.memory_space<vmem>>, %arg12: memref<16x8xf32, #tpu.memory_space<vmem>>) attributes {dimension_semantics = [#tpu.dimension_semantics<parallel>], iteration_bounds = array<i64: 1>, scalar_prefetch = 0 : i64, scratch_operands = 0 : i64, tpu.core_type = #tpu.core_type<tc>, window_params = [{transform_indices = @transform_0, window_bounds = array<i64: 16, 32>}, {pipeline_mode = #tpu.pipeline_mode<synchronous>, transform_indices = @transform_1, window_bounds = array<i64: 32, 128>}, {pipeline_mode = #tpu.pipeline_mode<synchronous>, transform_indices = @transform_2, window_bounds = array<i64: 1, 128>}, {pipeline_mode = #tpu.pipeline_mode<synchronous>, transform_indices = @transform_3, window_bounds = array<i64: 128, 256>}, {pipeline_mode = #tpu.pipeline_mode<synchronous>, transform_indices = @transform_4, window_bounds = array<i64: 1, 256>}, {pipeline_mode = #tpu.pipeline_mode<synchronous>, transform_indices = @transform_5, window_bounds = array<i64: 32, 2>}, {pipeline_mode = #tpu.pipeline_mode<synchronous>, transform_indices = @transform_6, window_bounds = array<i64: 1, 2>}, {pipeline_mode = #tpu.pipeline_mode<synchronous>, transform_indices = @transform_7, window_bounds = array<i64: 2, 256>}, {pipeline_mode = #tpu.pipeline_mode<synchronous>, transform_indices = @transform_8, window_bounds = array<i64: 1, 256>}, {pipeline_mode = #tpu.pipeline_mode<synchronous>, transform_indices = @transform_9, window_bounds = array<i64: 256, 8>}, {pipeline_mode = #tpu.pipeline_mode<synchronous>, transform_indices = @transform_10, window_bounds = array<i64: 8, 8>}, {transform_indices = @transform_11, window_bounds = array<i64: 16, 8>}]} {
    %c0 = arith.constant 0 : index
    %c0_0 = arith.constant 0 : index
    %0 = vector.load %arg1[%c0, %c0_0] : memref<16x32xf32, #tpu.memory_space<vmem>>, vector<16x32xf32>
    %1 = arith.truncf %0 : vector<16x32xf32> to vector<16x32xbf16>
    %c0_1 = arith.constant 0 : index
    %c0_2 = arith.constant 0 : index
    %2 = vector.load %arg2[%c0_1, %c0_2] : memref<32x128xbf16, #tpu.memory_space<vmem>>, vector<32x128xbf16>
    %cst = arith.constant dense<0.000000e+00> : vector<16x128xf32>
    %3 = tpu.matmul %1, %2, %cst {dimension_numbers = #tpu.dot_dimension_numbers<[1], [0], [0], [1], [0, 0, 1, 1], [], []>} : vector<16x32xbf16>, vector<32x128xbf16>, vector<16x128xf32> -> vector<16x128xf32>
    %c0_3 = arith.constant 0 : index
    %c0_4 = arith.constant 0 : index
    %4 = vector.load %arg3[%c0_3, %c0_4] : memref<1x128xf32, #tpu.memory_space<vmem>>, vector<1x128xf32>
    %5 = vector.broadcast %4 : vector<1x128xf32> to vector<16x128xf32>
    %6 = arith.addf %3, %5 : vector<16x128xf32>
    %cst_5 = arith.constant 0.000000e+00 : f32
    %7 = vector.broadcast %cst_5 : f32 to vector<16x128xf32>
    %8 = arith.maximumf %6, %7 : vector<16x128xf32>
    %9 = arith.truncf %8 : vector<16x128xf32> to vector<16x128xbf16>
    %c0_6 = arith.constant 0 : index
    %c0_7 = arith.constant 0 : index
    %10 = vector.load %arg4[%c0_6, %c0_7] : memref<128x256xbf16, #tpu.memory_space<vmem>>, vector<128x256xbf16>
    %cst_8 = arith.constant dense<0.000000e+00> : vector<16x256xf32>
    %11 = tpu.matmul %9, %10, %cst_8 {dimension_numbers = #tpu.dot_dimension_numbers<[1], [0], [0], [1], [0, 0, 1, 1], [], []>} : vector<16x128xbf16>, vector<128x256xbf16>, vector<16x256xf32> -> vector<16x256xf32>
    %c0_9 = arith.constant 0 : index
    %c0_10 = arith.constant 0 : index
    %12 = vector.load %arg5[%c0_9, %c0_10] : memref<1x256xf32, #tpu.memory_space<vmem>>, vector<1x256xf32>
    %13 = vector.broadcast %12 : vector<1x256xf32> to vector<16x256xf32>
    %14 = arith.addf %11, %13 : vector<16x256xf32>
    %15 = vector.extract_strided_slice %14 {offsets = [0, 0], sizes = [16, 32], strides = [1, 1]} : vector<16x256xf32> to vector<16x32xf32>
    %16 = vector.extract_strided_slice %14 {offsets = [0, 0], sizes = [16, 32], strides = [1, 1]} : vector<16x256xf32> to vector<16x32xf32>
    %17 = vector.extract_strided_slice %14 {offsets = [0, 32], sizes = [16, 32], strides = [1, 1]} : vector<16x256xf32> to vector<16x32xf32>
    %18 = arith.addf %15, %17 : vector<16x32xf32>
    %19 = arith.maximumf %16, %17 : vector<16x32xf32>
    %20 = vector.extract_strided_slice %14 {offsets = [0, 64], sizes = [16, 32], strides = [1, 1]} : vector<16x256xf32> to vector<16x32xf32>
    %21 = arith.addf %18, %20 : vector<16x32xf32>
    %22 = arith.maximumf %19, %20 : vector<16x32xf32>
    %23 = vector.extract_strided_slice %14 {offsets = [0, 96], sizes = [16, 32], strides = [1, 1]} : vector<16x256xf32> to vector<16x32xf32>
    %24 = arith.addf %21, %23 : vector<16x32xf32>
    %25 = arith.maximumf %22, %23 : vector<16x32xf32>
    %26 = vector.extract_strided_slice %14 {offsets = [0, 128], sizes = [16, 32], strides = [1, 1]} : vector<16x256xf32> to vector<16x32xf32>
    %27 = arith.addf %24, %26 : vector<16x32xf32>
    %28 = arith.maximumf %25, %26 : vector<16x32xf32>
    %29 = vector.extract_strided_slice %14 {offsets = [0, 160], sizes = [16, 32], strides = [1, 1]} : vector<16x256xf32> to vector<16x32xf32>
    %30 = arith.addf %27, %29 : vector<16x32xf32>
    %31 = arith.maximumf %28, %29 : vector<16x32xf32>
    %32 = vector.extract_strided_slice %14 {offsets = [0, 192], sizes = [16, 32], strides = [1, 1]} : vector<16x256xf32> to vector<16x32xf32>
    %33 = arith.addf %30, %32 : vector<16x32xf32>
    %34 = arith.maximumf %31, %32 : vector<16x32xf32>
    %35 = vector.extract_strided_slice %14 {offsets = [0, 224], sizes = [16, 32], strides = [1, 1]} : vector<16x256xf32> to vector<16x32xf32>
    %36 = arith.addf %33, %35 : vector<16x32xf32>
    %37 = arith.maximumf %34, %35 : vector<16x32xf32>
    %cst_11 = arith.constant 1.250000e-01 : f32
    %38 = vector.broadcast %cst_11 : f32 to vector<16x32xf32>
    %39 = arith.mulf %36, %38 : vector<16x32xf32>
    %c0_12 = arith.constant 0 : index
    %c0_13 = arith.constant 0 : index
    %40 = vector.load %arg6[%c0_12, %c0_13] : memref<32x2xf32, #tpu.memory_space<vmem>>, vector<32x2xf32>
    %c0_14 = arith.constant 0 : index
    %c0_15 = arith.constant 0 : index
    %41 = vector.load %arg7[%c0_14, %c0_15] : memref<1x2xf32, #tpu.memory_space<vmem>>, vector<1x2xf32>
    %cst_16 = arith.constant dense<0.000000e+00> : vector<16x2xf32>
    %42 = tpu.matmul %39, %40, %cst_16 {dimension_numbers = #tpu.dot_dimension_numbers<[1], [0], [0], [1], [0, 0, 1, 1], [], []>} : vector<16x32xf32>, vector<32x2xf32>, vector<16x2xf32> -> vector<16x2xf32>
    %43 = vector.broadcast %41 : vector<1x2xf32> to vector<16x2xf32>
    %44 = arith.addf %42, %43 : vector<16x2xf32>
    %cst_17 = arith.constant 0.000000e+00 : f32
    %45 = vector.broadcast %cst_17 : f32 to vector<16x2xf32>
    %46 = arith.maximumf %44, %45 : vector<16x2xf32>
    %cst_18 = arith.constant dense<0.000000e+00> : vector<16x2xf32>
    %47 = tpu.matmul %37, %40, %cst_18 {dimension_numbers = #tpu.dot_dimension_numbers<[1], [0], [0], [1], [0, 0, 1, 1], [], []>} : vector<16x32xf32>, vector<32x2xf32>, vector<16x2xf32> -> vector<16x2xf32>
    %48 = vector.broadcast %41 : vector<1x2xf32> to vector<16x2xf32>
    %49 = arith.addf %47, %48 : vector<16x2xf32>
    %cst_19 = arith.constant 0.000000e+00 : f32
    %50 = vector.broadcast %cst_19 : f32 to vector<16x2xf32>
    %51 = arith.maximumf %49, %50 : vector<16x2xf32>
    %52 = arith.addf %46, %51 : vector<16x2xf32>
    %c0_20 = arith.constant 0 : index
    %c0_21 = arith.constant 0 : index
    %53 = vector.load %arg8[%c0_20, %c0_21] : memref<2x256xf32, #tpu.memory_space<vmem>>, vector<2x256xf32>
    %cst_22 = arith.constant dense<0.000000e+00> : vector<16x256xf32>
    %54 = tpu.matmul %52, %53, %cst_22 {dimension_numbers = #tpu.dot_dimension_numbers<[1], [0], [0], [1], [0, 0, 1, 1], [], []>} : vector<16x2xf32>, vector<2x256xf32>, vector<16x256xf32> -> vector<16x256xf32>
    %c0_23 = arith.constant 0 : index
    %c0_24 = arith.constant 0 : index
    %55 = vector.load %arg9[%c0_23, %c0_24] : memref<1x256xf32, #tpu.memory_space<vmem>>, vector<1x256xf32>
    %56 = vector.broadcast %55 : vector<1x256xf32> to vector<16x256xf32>
    %57 = arith.addf %54, %56 : vector<16x256xf32>
    %58 = arith.negf %57 : vector<16x256xf32>
    %59 = math.exp %58 : vector<16x256xf32>
    %cst_25 = arith.constant 1.000000e+00 : f32
    %60 = vector.broadcast %cst_25 : f32 to vector<16x256xf32>
    %61 = arith.addf %60, %59 : vector<16x256xf32>
    %62 = arith.divf %60, %61 : vector<16x256xf32>
    %63 = arith.mulf %14, %62 : vector<16x256xf32>
    %c0_26 = arith.constant 0 : index
    %c0_27 = arith.constant 0 : index
    %64 = vector.load %arg10[%c0_26, %c0_27] : memref<256x8xf32, #tpu.memory_space<vmem>>, vector<256x8xf32>
    %c0_28 = arith.constant 0 : index
    %c0_29 = arith.constant 0 : index
    %65 = vector.load %arg11[%c0_28, %c0_29] : memref<8x8xf32, #tpu.memory_space<vmem>>, vector<8x8xf32>
    %cst_30 = arith.constant dense<0.000000e+00> : vector<16x8xf32>
    %66 = tpu.matmul %63, %64, %cst_30 {dimension_numbers = #tpu.dot_dimension_numbers<[1], [0], [0], [1], [0, 0, 1, 1], [], []>} : vector<16x256xf32>, vector<256x8xf32>, vector<16x8xf32> -> vector<16x8xf32>
    %67 = vector.extract_strided_slice %63 {offsets = [0, 0], sizes = [16, 32], strides = [1, 1]} : vector<16x256xf32> to vector<16x32xf32>
    %cst_31 = arith.constant dense<0xFF800000> : vector<16xf32>
    %68 = vector.multi_reduction <maximumf>, %67, %cst_31 [1] : vector<16x32xf32> to vector<16xf32>
    %69 = vector.shape_cast %68 : vector<16xf32> to vector<16x1xf32>
    %70 = vector.extract_strided_slice %65 {offsets = [0, 0], sizes = [1, 8], strides = [1, 1]} : vector<8x8xf32> to vector<1x8xf32>
    %71 = vector.broadcast %69 : vector<16x1xf32> to vector<16x8xf32>
    %72 = vector.broadcast %70 : vector<1x8xf32> to vector<16x8xf32>
    %73 = arith.mulf %71, %72 : vector<16x8xf32>
    %74 = arith.addf %66, %73 : vector<16x8xf32>
    %75 = vector.extract_strided_slice %63 {offsets = [0, 32], sizes = [16, 32], strides = [1, 1]} : vector<16x256xf32> to vector<16x32xf32>
    %cst_32 = arith.constant dense<0xFF800000> : vector<16xf32>
    %76 = vector.multi_reduction <maximumf>, %75, %cst_32 [1] : vector<16x32xf32> to vector<16xf32>
    %77 = vector.shape_cast %76 : vector<16xf32> to vector<16x1xf32>
    %78 = vector.extract_strided_slice %65 {offsets = [1, 0], sizes = [1, 8], strides = [1, 1]} : vector<8x8xf32> to vector<1x8xf32>
    %79 = vector.broadcast %77 : vector<16x1xf32> to vector<16x8xf32>
    %80 = vector.broadcast %78 : vector<1x8xf32> to vector<16x8xf32>
    %81 = arith.mulf %79, %80 : vector<16x8xf32>
    %82 = arith.addf %74, %81 : vector<16x8xf32>
    %83 = vector.extract_strided_slice %63 {offsets = [0, 64], sizes = [16, 32], strides = [1, 1]} : vector<16x256xf32> to vector<16x32xf32>
    %cst_33 = arith.constant dense<0xFF800000> : vector<16xf32>
    %84 = vector.multi_reduction <maximumf>, %83, %cst_33 [1] : vector<16x32xf32> to vector<16xf32>
    %85 = vector.shape_cast %84 : vector<16xf32> to vector<16x1xf32>
    %86 = vector.extract_strided_slice %65 {offsets = [2, 0], sizes = [1, 8], strides = [1, 1]} : vector<8x8xf32> to vector<1x8xf32>
    %87 = vector.broadcast %85 : vector<16x1xf32> to vector<16x8xf32>
    %88 = vector.broadcast %86 : vector<1x8xf32> to vector<16x8xf32>
    %89 = arith.mulf %87, %88 : vector<16x8xf32>
    %90 = arith.addf %82, %89 : vector<16x8xf32>
    %91 = vector.extract_strided_slice %63 {offsets = [0, 96], sizes = [16, 32], strides = [1, 1]} : vector<16x256xf32> to vector<16x32xf32>
    %cst_34 = arith.constant dense<0xFF800000> : vector<16xf32>
    %92 = vector.multi_reduction <maximumf>, %91, %cst_34 [1] : vector<16x32xf32> to vector<16xf32>
    %93 = vector.shape_cast %92 : vector<16xf32> to vector<16x1xf32>
    %94 = vector.extract_strided_slice %65 {offsets = [3, 0], sizes = [1, 8], strides = [1, 1]} : vector<8x8xf32> to vector<1x8xf32>
    %95 = vector.broadcast %93 : vector<16x1xf32> to vector<16x8xf32>
    %96 = vector.broadcast %94 : vector<1x8xf32> to vector<16x8xf32>
    %97 = arith.mulf %95, %96 : vector<16x8xf32>
    %98 = arith.addf %90, %97 : vector<16x8xf32>
    %99 = vector.extract_strided_slice %63 {offsets = [0, 128], sizes = [16, 32], strides = [1, 1]} : vector<16x256xf32> to vector<16x32xf32>
    %cst_35 = arith.constant dense<0xFF800000> : vector<16xf32>
    %100 = vector.multi_reduction <maximumf>, %99, %cst_35 [1] : vector<16x32xf32> to vector<16xf32>
    %101 = vector.shape_cast %100 : vector<16xf32> to vector<16x1xf32>
    %102 = vector.extract_strided_slice %65 {offsets = [4, 0], sizes = [1, 8], strides = [1, 1]} : vector<8x8xf32> to vector<1x8xf32>
    %103 = vector.broadcast %101 : vector<16x1xf32> to vector<16x8xf32>
    %104 = vector.broadcast %102 : vector<1x8xf32> to vector<16x8xf32>
    %105 = arith.mulf %103, %104 : vector<16x8xf32>
    %106 = arith.addf %98, %105 : vector<16x8xf32>
    %107 = vector.extract_strided_slice %63 {offsets = [0, 160], sizes = [16, 32], strides = [1, 1]} : vector<16x256xf32> to vector<16x32xf32>
    %cst_36 = arith.constant dense<0xFF800000> : vector<16xf32>
    %108 = vector.multi_reduction <maximumf>, %107, %cst_36 [1] : vector<16x32xf32> to vector<16xf32>
    %109 = vector.shape_cast %108 : vector<16xf32> to vector<16x1xf32>
    %110 = vector.extract_strided_slice %65 {offsets = [5, 0], sizes = [1, 8], strides = [1, 1]} : vector<8x8xf32> to vector<1x8xf32>
    %111 = vector.broadcast %109 : vector<16x1xf32> to vector<16x8xf32>
    %112 = vector.broadcast %110 : vector<1x8xf32> to vector<16x8xf32>
    %113 = arith.mulf %111, %112 : vector<16x8xf32>
    %114 = arith.addf %106, %113 : vector<16x8xf32>
    %115 = vector.extract_strided_slice %63 {offsets = [0, 192], sizes = [16, 32], strides = [1, 1]} : vector<16x256xf32> to vector<16x32xf32>
    %cst_37 = arith.constant dense<0xFF800000> : vector<16xf32>
    %116 = vector.multi_reduction <maximumf>, %115, %cst_37 [1] : vector<16x32xf32> to vector<16xf32>
    %117 = vector.shape_cast %116 : vector<16xf32> to vector<16x1xf32>
    %118 = vector.extract_strided_slice %65 {offsets = [6, 0], sizes = [1, 8], strides = [1, 1]} : vector<8x8xf32> to vector<1x8xf32>
    %119 = vector.broadcast %117 : vector<16x1xf32> to vector<16x8xf32>
    %120 = vector.broadcast %118 : vector<1x8xf32> to vector<16x8xf32>
    %121 = arith.mulf %119, %120 : vector<16x8xf32>
    %122 = arith.addf %114, %121 : vector<16x8xf32>
    %123 = vector.extract_strided_slice %63 {offsets = [0, 224], sizes = [16, 32], strides = [1, 1]} : vector<16x256xf32> to vector<16x32xf32>
    %cst_38 = arith.constant dense<0xFF800000> : vector<16xf32>
    %124 = vector.multi_reduction <maximumf>, %123, %cst_38 [1] : vector<16x32xf32> to vector<16xf32>
    %125 = vector.shape_cast %124 : vector<16xf32> to vector<16x1xf32>
    %126 = vector.extract_strided_slice %65 {offsets = [7, 0], sizes = [1, 8], strides = [1, 1]} : vector<8x8xf32> to vector<1x8xf32>
    %127 = vector.broadcast %125 : vector<16x1xf32> to vector<16x8xf32>
    %128 = vector.broadcast %126 : vector<1x8xf32> to vector<16x8xf32>
    %129 = arith.mulf %127, %128 : vector<16x8xf32>
    %130 = arith.addf %122, %129 : vector<16x8xf32>
    %c0_39 = arith.constant 0 : index
    %c0_40 = arith.constant 0 : index
    %131 = vector.load %arg12[%c0_39, %c0_40] : memref<16x8xf32, #tpu.memory_space<vmem>>, vector<16x8xf32>
    tpu.vector_store %arg12[%c0_39, %c0_40], %130 {strides = array<i32>} : memref<16x8xf32, #tpu.memory_space<vmem>>, vector<16x8xf32>,
    return
  }
  func.func @transform_0(%arg0: i32) -> (i32, i32) {
    %c0_i32 = arith.constant 0 : i32
    %c0_i32_0 = arith.constant 0 : i32
    return %arg0, %c0_i32 : i32, i32
  }
  func.func @transform_1(%arg0: i32) -> (i32, i32) {
    %c0_i32 = arith.constant 0 : i32
    %c0_i32_0 = arith.constant 0 : i32
    %c0_i32_1 = arith.constant 0 : i32
    return %c0_i32, %c0_i32_0 : i32, i32
  }
  func.func @transform_2(%arg0: i32) -> (i32, i32) {
    %c0_i32 = arith.constant 0 : i32
    %c0_i32_0 = arith.constant 0 : i32
    %c0_i32_1 = arith.constant 0 : i32
    return %c0_i32, %c0_i32_0 : i32, i32
  }
  func.func @transform_3(%arg0: i32) -> (i32, i32) {
    %c0_i32 = arith.constant 0 : i32
    %c0_i32_0 = arith.constant 0 : i32
    %c0_i32_1 = arith.constant 0 : i32
    return %c0_i32, %c0_i32_0 : i32, i32
  }
  func.func @transform_4(%arg0: i32) -> (i32, i32) {
    %c0_i32 = arith.constant 0 : i32
    %c0_i32_0 = arith.constant 0 : i32
    %c0_i32_1 = arith.constant 0 : i32
    return %c0_i32, %c0_i32_0 : i32, i32
  }
  func.func @transform_5(%arg0: i32) -> (i32, i32) {
    %c0_i32 = arith.constant 0 : i32
    %c0_i32_0 = arith.constant 0 : i32
    %c0_i32_1 = arith.constant 0 : i32
    return %c0_i32, %c0_i32_0 : i32, i32
  }
  func.func @transform_6(%arg0: i32) -> (i32, i32) {
    %c0_i32 = arith.constant 0 : i32
    %c0_i32_0 = arith.constant 0 : i32
    %c0_i32_1 = arith.constant 0 : i32
    return %c0_i32, %c0_i32_0 : i32, i32
  }
  func.func @transform_7(%arg0: i32) -> (i32, i32) {
    %c0_i32 = arith.constant 0 : i32
    %c0_i32_0 = arith.constant 0 : i32
    %c0_i32_1 = arith.constant 0 : i32
    return %c0_i32, %c0_i32_0 : i32, i32
  }
  func.func @transform_8(%arg0: i32) -> (i32, i32) {
    %c0_i32 = arith.constant 0 : i32
    %c0_i32_0 = arith.constant 0 : i32
    %c0_i32_1 = arith.constant 0 : i32
    return %c0_i32, %c0_i32_0 : i32, i32
  }
  func.func @transform_9(%arg0: i32) -> (i32, i32) {
    %c0_i32 = arith.constant 0 : i32
    %c0_i32_0 = arith.constant 0 : i32
    %c0_i32_1 = arith.constant 0 : i32
    return %c0_i32, %c0_i32_0 : i32, i32
  }
  func.func @transform_10(%arg0: i32) -> (i32, i32) {
    %c0_i32 = arith.constant 0 : i32
    %c0_i32_0 = arith.constant 0 : i32
    %c0_i32_1 = arith.constant 0 : i32
    return %c0_i32, %c0_i32_0 : i32, i32
  }
  func.func @transform_11(%arg0: i32) -> (i32, i32) {
    %c0_i32 = arith.constant 0 : i32
    %c0_i32_0 = arith.constant 0 : i32
    return %arg0, %c0_i32 : i32, i32
  }
}

</mosaic_0001>

<llo_original>
// kernel: tpu_custom_call.1
$region0: #{tpu_custom_call.1}
  #allocation0 [shape = 'u32[]', space=smem, size = 0x4, offset = 0x4, fixed_abs, tag = 'smem constant byte address 0x4 - core index']
  #allocation1 [shape = 'u32[72,128]{1,0:T(1,128)}', space=vmem, size = 0x9000, scoped, tag = 'internal scratch']
  %s0 = inlined_call_operand.vmem [shape: f32[16,32], index: 0, kind: input, shape index: {}]
  %s1 = inlined_call_operand.vmem [shape: bf16[32,128], index: 1, kind: input, shape index: {}]
  %s2 = inlined_call_operand.vmem [shape: f32[1,128], index: 2, kind: input, shape index: {}]
  %s3 = inlined_call_operand.vmem [shape: bf16[128,256], index: 3, kind: input, shape index: {}]
  %s4 = inlined_call_operand.vmem [shape: f32[1,256], index: 4, kind: input, shape index: {}]
  %s5 = inlined_call_operand.vmem [shape: f32[32,2], index: 5, kind: input, shape index: {}]
  %s6 = inlined_call_operand.vmem [shape: f32[1,2], index: 6, kind: input, shape index: {}]
  %s7 = inlined_call_operand.vmem [shape: f32[2,256], index: 7, kind: input, shape index: {}]
  %s8 = inlined_call_operand.vmem [shape: f32[1,256], index: 8, kind: input, shape index: {}]
  %s9 = inlined_call_operand.vmem [shape: f32[256,8], index: 9, kind: input, shape index: {}]
  %s10 = inlined_call_operand.vmem [shape: f32[8,8], index: 10, kind: input, shape index: {}]
  %s11 = inlined_call_operand.vmem [shape: f32[16,8], index: 11, kind: output, shape index: {}]
  %s12 = sld [smem:[#allocation0]]
  $region54: #{tpu_custom_call.1} parent=0
    _
  %s14 = ssub.s32 1, %s12
  %s15 = scalar_select 0, %s14, %s12
  // Predicated region
  $region2: #{tpu_custom_call.1} parent=0 // pred_check
    _
  $region3: #{tpu_custom_call.1} parent=0 // pred_check_branch
    %17 = sbr.rel (0) target = $region5
  $region4: #{tpu_custom_call.1} parent=0 // pred_region
    _
  $region5: #{tpu_custom_call.1} parent=0 // pred_fallthru
    _
  // Predicated region
  $region6: #{tpu_custom_call.1} parent=0 // pred_check
    _
  $region7: #{tpu_custom_call.1} parent=0 // pred_check_branch
    %19 = sbr.rel (0) target = $region9
  $region8: #{tpu_custom_call.1} parent=0 // pred_region
    _
  $region9: #{tpu_custom_call.1} parent=0 // pred_fallthru
    _
  // Predicated region
  $region10: #{tpu_custom_call.1} parent=0 // pred_check
    _
  $region11: #{tpu_custom_call.1} parent=0 // pred_check_branch
    %21 = sbr.rel (0) target = $region13
  $region12: #{tpu_custom_call.1} parent=0 // pred_region
    _
  $region13: #{tpu_custom_call.1} parent=0 // pred_fallthru
    _
  // Predicated region
  $region14: #{tpu_custom_call.1} parent=0 // pred_check
    _
  $region15: #{tpu_custom_call.1} parent=0 // pred_check_branch
    %23 = sbr.rel (0) target = $region17
  $region16: #{tpu_custom_call.1} parent=0 // pred_region
    _
  $region17: #{tpu_custom_call.1} parent=0 // pred_fallthru
    _
  // Predicated region
  $region18: #{tpu_custom_call.1} parent=0 // pred_check
    _
  $region19: #{tpu_custom_call.1} parent=0 // pred_check_branch
    %25 = sbr.rel (0) target = $region21
  $region20: #{tpu_custom_call.1} parent=0 // pred_region
    _
  $region21: #{tpu_custom_call.1} parent=0 // pred_fallthru
    _
  // Predicated region
  $region22: #{tpu_custom_call.1} parent=0 // pred_check
    _
  $region23: #{tpu_custom_call.1} parent=0 // pred_check_branch
    %27 = sbr.rel (0) target = $region25
  $region24: #{tpu_custom_call.1} parent=0 // pred_region
    _
  $region25: #{tpu_custom_call.1} parent=0 // pred_fallthru
    _
  // Predicated region
  $region26: #{tpu_custom_call.1} parent=0 // pred_check
    _
  $region27: #{tpu_custom_call.1} parent=0 // pred_check_branch
    %29 = sbr.rel (0) target = $region29
  $region28: #{tpu_custom_call.1} parent=0 // pred_region
    _
  $region29: #{tpu_custom_call.1} parent=0 // pred_fallthru
    _
  // Predicated region
  $region30: #{tpu_custom_call.1} parent=0 // pred_check
    _
  $region31: #{tpu_custom_call.1} parent=0 // pred_check_branch
    %31 = sbr.rel (0) target = $region33
  $region32: #{tpu_custom_call.1} parent=0 // pred_region
    _
  $region33: #{tpu_custom_call.1} parent=0 // pred_fallthru
    _
  // Predicated region
  $region34: #{tpu_custom_call.1} parent=0 // pred_check
    _
  $region35: #{tpu_custom_call.1} parent=0 // pred_check_branch
    %33 = sbr.rel (0) target = $region37
  $region36: #{tpu_custom_call.1} parent=0 // pred_region
    _
  $region37: #{tpu_custom_call.1} parent=0 // pred_fallthru
    _
  // Predicated region
  $region38: #{tpu_custom_call.1} parent=0 // pred_check
    _
  $region39: #{tpu_custom_call.1} parent=0 // pred_check_branch
    %35 = sbr.rel (0) target = $region41
  $region40: #{tpu_custom_call.1} parent=0 // pred_region
    _
  $region41: #{tpu_custom_call.1} parent=0 // pred_fallthru
    _
  // Predicated region
  $region42: #{tpu_custom_call.1} parent=0 // pred_check
    _
  $region43: #{tpu_custom_call.1} parent=0 // pred_check_branch
    %37 = sbr.rel (0) target = $region45
  $region44: #{tpu_custom_call.1} parent=0 // pred_region
    _
  $region45: #{tpu_custom_call.1} parent=0 // pred_fallthru
    _
  %v39 = vld [vmem:[%s0] sm:$0xff]
  %v40 = vld [vmem:[%s0 + $0x8] sm:$0xff]
  %v41 = vpack.c.bf16 %v40, %v39
  %v42 = vld [vmem:[%s1] sm:$0xf]
  %v43 = vld [vmem:[%s1 + $0x4] sm:$0xf]
  %v44 = vld [vmem:[%s1 + $0x8] sm:$0xf]
  %v45 = vld [vmem:[%s1 + $0xc] sm:$0xf]
  %v46 = vld [vmem:[%s2] sm:$0x1]
  %v48 = vperm.slane %v46, 0
  %v54 = vunpack.c.l.b16 %v42
  %v55 = vunpack.c.l.b16 %v43
  %v56 = vunpack.c.l.b16 %v44
  %v57 = vunpack.c.l.b16 %v45
  %v58 = vpack.c.b16 %v55, %v54
  %v59 = vpack.c.b16 %v57, %v56
  %vm62 = vcmask 261120
  %v64 = vsel %vm62, %v41, 0
  %66 = vmatpush.bf16.msra.mxu0 0
  %67 = vmatpush.bf16.msra.mxu0 0
  %68 = vmatpush.bf16.msra.mxu0 0
  %69 = vmatpush.bf16.msra.mxu0 0
  %70 = vmatpush.bf16.msra.mxu0 0
  %71 = vmatpush.bf16.msra.mxu0 0
  %72 = vmatpush.bf16.msra.mxu0 %v59
  %73 = vmatpush.bf16.msra.mxu0 %v58
  %74 = vmatmul.bf16.gmra.mxu0 %v64
  %v75 = vpop.f32.mrf.mxu0
  %v76 = vadd.f32 %v48, %v75
  %v77 = vpop.f32.mrf.mxu0
  %v78 = vadd.f32 %v48, %v77
  %79 = vdwg.mxu0
  %v80 = vmax.f32 %v76, 0.0
  %v81 = vmax.f32 %v78, 0.0
  %v82 = vpack.c.bf16 %v81, %v80
  %v83 = vld [vmem:[%s3] sm:$0xff]
  %v84 = vld [vmem:[%s3 + $0x8] sm:$0xff]
  %v85 = vld [vmem:[%s3 + $0x10] sm:$0xff]
  %v86 = vld [vmem:[%s3 + $0x18] sm:$0xff]
  %v87 = vld [vmem:[%s3 + $0x20] sm:$0xff]
  %v88 = vld [vmem:[%s3 + $0x28] sm:$0xff]
  %v89 = vld [vmem:[%s3 + $0x30] sm:$0xff]
  %v90 = vld [vmem:[%s3 + $0x38] sm:$0xff]
  %v91 = vld [vmem:[%s3 + $0x40] sm:$0xff]
  %v92 = vld [vmem:[%s3 + $0x48] sm:$0xff]
  %v93 = vld [vmem:[%s3 + $0x50] sm:$0xff]
  %v94 = vld [vmem:[%s3 + $0x58] sm:$0xff]
  %v95 = vld [vmem:[%s3 + $0x60] sm:$0xff]
  %v96 = vld [vmem:[%s3 + $0x68] sm:$0xff]
  %v97 = vld [vmem:[%s3 + $0x70] sm:$0xff]
  %v98 = vld [vmem:[%s3 + $0x78] sm:$0xff]
  %v99 = vld [vmem:[%s4] sm:$0x3]
  %v101 = vperm.slane %v99, 0
  %v102 = vperm.slane %v99, 1
  %v121 = vunpack.c.l.b16 %v83
  %v122 = vunpack.c.h.b16 %v83
  %v123 = vunpack.c.l.b16 %v84
  %v124 = vunpack.c.h.b16 %v84
  %v125 = vunpack.c.l.b16 %v85
  %v126 = vunpack.c.h.b16 %v85
  %v127 = vunpack.c.l.b16 %v86
  %v128 = vunpack.c.h.b16 %v86
  %v129 = vunpack.c.l.b16 %v87
  %v130 = vunpack.c.h.b16 %v87
  %v131 = vunpack.c.l.b16 %v88
  %v132 = vunpack.c.h.b16 %v88
  %v133 = vunpack.c.l.b16 %v89
  %v134 = vunpack.c.h.b16 %v89
  %v135 = vunpack.c.l.b16 %v90
  %v136 = vunpack.c.h.b16 %v90
  %v137 = vunpack.c.l.b16 %v91
  %v138 = vunpack.c.h.b16 %v91
  %v139 = vunpack.c.l.b16 %v92
  %v140 = vunpack.c.h.b16 %v92
  %v141 = vunpack.c.l.b16 %v93
  %v142 = vunpack.c.h.b16 %v93
  %v143 = vunpack.c.l.b16 %v94
  %v144 = vunpack.c.h.b16 %v94
  %v145 = vunpack.c.l.b16 %v95
  %v146 = vunpack.c.h.b16 %v95
  %v147 = vunpack.c.l.b16 %v96
  %v148 = vunpack.c.h.b16 %v96
  %v149 = vunpack.c.l.b16 %v97
  %v150 = vunpack.c.h.b16 %v97
  %v151 = vunpack.c.l.b16 %v98
  %v152 = vunpack.c.h.b16 %v98
  %v153 = vpack.c.b16 %v123, %v121
  %v154 = vpack.c.b16 %v124, %v122
  %v155 = vpack.c.b16 %v127, %v125
  %v156 = vpack.c.b16 %v128, %v126
  %v157 = vpack.c.b16 %v131, %v129
  %v158 = vpack.c.b16 %v132, %v130
  %v159 = vpack.c.b16 %v135, %v133
  %v160 = vpack.c.b16 %v136, %v134
  %v161 = vpack.c.b16 %v139, %v137
  %v162 = vpack.c.b16 %v140, %v138
  %v163 = vpack.c.b16 %v143, %v141
  %v164 = vpack.c.b16 %v144, %v142
  %v165 = vpack.c.b16 %v147, %v145
  %v166 = vpack.c.b16 %v148, %v146
  %v167 = vpack.c.b16 %v151, %v149
  %v168 = vpack.c.b16 %v152, %v150
  %185 = vmatpush.bf16.msra.mxu0 %v167
  %186 = vmatpush.bf16.msra.mxu0 %v165
  %187 = vmatpush.bf16.msra.mxu0 %v163
  %188 = vmatpush.bf16.msra.mxu0 %v161
  %189 = vmatpush.bf16.msra.mxu0 %v159
  %190 = vmatpush.bf16.msra.mxu0 %v157
  %191 = vmatpush.bf16.msra.mxu0 %v155
  %192 = vmatpush.bf16.msra.mxu0 %v153
  %193 = vmatmul.bf16.gmra.mxu0 %v82
  %v194 = vpop.f32.mrf.mxu0
  %v195 = vadd.f32 %v101, %v194
  %v196 = vpop.f32.mrf.mxu0
  %v197 = vadd.f32 %v101, %v196
  %198 = vdwg.mxu0
  %199 = vmatpush.bf16.msra.mxu0 %v168
  %200 = vmatpush.bf16.msra.mxu0 %v166
  %201 = vmatpush.bf16.msra.mxu0 %v164
  %202 = vmatpush.bf16.msra.mxu0 %v162
  %203 = vmatpush.bf16.msra.mxu0 %v160
  %204 = vmatpush.bf16.msra.mxu0 %v158
  %205 = vmatpush.bf16.msra.mxu0 %v156
  %206 = vmatpush.bf16.msra.mxu0 %v154
  %207 = vmatmul.bf16.gmra.mxu0 %v82
  %v208 = vpop.f32.mrf.mxu0
  %v209 = vadd.f32 %v102, %v208
  %v210 = vpop.f32.mrf.mxu0
  %v211 = vadd.f32 %v102, %v210
  %212 = vdwg.mxu0
  %215 = vrot.lane.b32.xlu0 %v195, 96
  %v216 = vpop.permute.xlu0 %215
  %217 = vrot.lane.b32.xlu0 %v197, 96
  %v218 = vpop.permute.xlu0 %217
  %v221 = vadd.f32 %v195, %v216
  %v222 = vadd.f32 %v197, %v218
  %v223 = vmax.f32 %v195, %v216
  %v224 = vmax.f32 %v197, %v218
  %225 = vrot.lane.b32.xlu0 %v195, 64
  %v226 = vpop.permute.xlu0 %225
  %227 = vrot.lane.b32.xlu0 %v197, 64
  %v228 = vpop.permute.xlu0 %227
  %v231 = vadd.f32 %v221, %v226
  %v232 = vadd.f32 %v222, %v228
  %v233 = vmax.f32 %v223, %v226
  %v234 = vmax.f32 %v224, %v228
  %235 = vrot.lane.b32.xlu0 %v195, 32
  %v236 = vpop.permute.xlu0 %235
  %237 = vrot.lane.b32.xlu0 %v197, 32
  %v238 = vpop.permute.xlu0 %237
  %v241 = vadd.f32 %v231, %v236
  %v242 = vadd.f32 %v232, %v238
  %v243 = vmax.f32 %v233, %v236
  %v244 = vmax.f32 %v234, %v238
  %v245 = vadd.f32 %v241, %v209
  %v246 = vadd.f32 %v242, %v211
  %v247 = vmax.f32 %v243, %v209
  %v248 = vmax.f32 %v244, %v211
  %251 = vrot.lane.b32.xlu0 %v209, 96
  %v252 = vpop.permute.xlu0 %251
  %253 = vrot.lane.b32.xlu0 %v211, 96
  %v254 = vpop.permute.xlu0 %253
  %v257 = vadd.f32 %v245, %v252
  %v258 = vadd.f32 %v246, %v254
  %v259 = vmax.f32 %v247, %v252
  %v260 = vmax.f32 %v248, %v254
  %261 = vrot.lane.b32.xlu0 %v209, 64
  %v262 = vpop.permute.xlu0 %261
  %263 = vrot.lane.b32.xlu0 %v211, 64
  %v264 = vpop.permute.xlu0 %263
  %v267 = vadd.f32 %v257, %v262
  %v268 = vadd.f32 %v258, %v264
  %v269 = vmax.f32 %v259, %v262
  %v270 = vmax.f32 %v260, %v264
  %271 = vrot.lane.b32.xlu0 %v209, 32
  %v272 = vpop.permute.xlu0 %271
  %273 = vrot.lane.b32.xlu0 %v211, 32
  %v274 = vpop.permute.xlu0 %273
  %v277 = vadd.f32 %v267, %v272
  %v278 = vadd.f32 %v268, %v274
  %v279 = vmax.f32 %v269, %v272
  %v280 = vmax.f32 %v270, %v274
  %v281 = vmul.f32 %v277, 0.125
  %v282 = vmul.f32 %v278, 0.125
  %v283 = vld [vmem:[%s5] sm:$0xff]
  %v284 = vld [vmem:[%s5 + $0x8] sm:$0xff]
  %v285 = vld [vmem:[%s5 + $0x10] sm:$0xff]
  %v286 = vld [vmem:[%s5 + $0x18] sm:$0xff]
  %v287 = vld [vmem:[%s6] sm:$0x1]
  %v289 = vperm.slane %v287, 0
  %v292 = vsel %vm62, %v281, 0
  %v295 = vsel %vm62, %v282, 0
  %297 = vmatpush.msra.mxu0 0.0
  %298 = vmatpush.msra.mxu0 0.0
  %299 = vmatpush.msra.mxu0 0.0
  %300 = vmatpush.msra.mxu0 0.0
  %301 = vmatpush.msra.mxu0 0.0
  %302 = vmatpush.msra.mxu0 0.0
  %303 = vmatpush.msra.mxu0 0.0
  %304 = vmatpush.msra.mxu0 0.0
  %305 = vmatpush.msra.mxu0 0.0
  %306 = vmatpush.msra.mxu0 0.0
  %307 = vmatpush.msra.mxu0 0.0
  %308 = vmatpush.msra.mxu0 0.0
  %309 = vmatpush.msra.mxu0 %v286
  %310 = vmatpush.msra.mxu0 %v285
  %311 = vmatpush.msra.mxu0 %v284
  %312 = vmatpush.msra.mxu0 %v283
  %313 = vmatmul.f32.gmra.mxu0 %v292
  %v314 = vpop.f32.mrf.mxu0
  %v315 = vadd.f32 %v289, %v314
  %316 = vmatmul.f32.gmra.mxu0 %v295
  %v317 = vpop.f32.mrf.mxu0
  %v318 = vadd.f32 %v289, %v317
  %319 = vdwg.mxu0
  %v320 = vmax.f32 %v315, 0.0
  %v321 = vmax.f32 %v318, 0.0
  %v323 = vsel %vm62, %v279, 0
  %v326 = vsel %vm62, %v280, 0
  %328 = vmatpush.msra.mxu0 0.0
  %329 = vmatpush.msra.mxu0 0.0
  %330 = vmatpush.msra.mxu0 0.0
  %331 = vmatpush.msra.mxu0 0.0
  %332 = vmatpush.msra.mxu0 0.0
  %333 = vmatpush.msra.mxu0 0.0
  %334 = vmatpush.msra.mxu0 0.0
  %335 = vmatpush.msra.mxu0 0.0
  %336 = vmatpush.msra.mxu0 0.0
  %337 = vmatpush.msra.mxu0 0.0
  %338 = vmatpush.msra.mxu0 0.0
  %339 = vmatpush.msra.mxu0 0.0
  %340 = vmatpush.msra.mxu0 %v286
  %341 = vmatpush.msra.mxu0 %v285
  %342 = vmatpush.msra.mxu0 %v284
  %343 = vmatpush.msra.mxu0 %v283
  %344 = vmatmul.f32.gmra.mxu0 %v323
  %v345 = vpop.f32.mrf.mxu0
  %v346 = vadd.f32 %v289, %v345
  %347 = vmatmul.f32.gmra.mxu0 %v326
  %v348 = vpop.f32.mrf.mxu0
  %v349 = vadd.f32 %v289, %v348
  %350 = vdwg.mxu0
  %v351 = vmax.f32 %v346, 0.0
  %v352 = vmax.f32 %v349, 0.0
  %v353 = vadd.f32 %v320, %v351
  %v354 = vadd.f32 %v321, %v352
  %v355 = vld [vmem:[%s7] sm:$0xf]
  %v356 = vld [vmem:[%s8] sm:$0x3]
  %v358 = vperm.slane %v356, 0
  %v359 = vperm.slane %v356, 1
  %363 = vst [vmem:[#allocation1] ss:$4 sm:$0xff] %v355
  %v364 = vld.sshfl [vmem:[#allocation1] sm:$0xff pattern:$0x73625140]
  %v365 = vld.sshfl [vmem:[#allocation1 + $0x8] sm:$0xff pattern:$0x73625140]
  %vm366 = vcmask 15360
  %v368 = vsel %vm366, %v353, 0
  %v371 = vsel %vm366, %v354, 0
  %vm373 = vcmask 1041408
  %v374 = vsel %vm373, %v364, 0
  %v376 = vsel %vm373, %v365, 0
  %378 = vmatpush.msra.mxu0 0.0
  %379 = vmatpush.msra.mxu0 0.0
  %380 = vmatpush.msra.mxu0 0.0
  %381 = vmatpush.msra.mxu0 0.0
  %382 = vmatpush.msra.mxu0 0.0
  %383 = vmatpush.msra.mxu0 0.0
  %384 = vmatpush.msra.mxu0 0.0
  %385 = vmatpush.msra.mxu0 0.0
  %386 = vmatpush.msra.mxu0 0.0
  %387 = vmatpush.msra.mxu0 0.0
  %388 = vmatpush.msra.mxu0 0.0
  %389 = vmatpush.msra.mxu0 0.0
  %390 = vmatpush.msra.mxu0 0.0
  %391 = vmatpush.msra.mxu0 0.0
  %392 = vmatpush.msra.mxu0 0.0
  %393 = vmatpush.msra.mxu0 %v374
  %394 = vmatmul.f32.gmra.mxu0 %v368
  %v395 = vpop.f32.mrf.mxu0
  %v396 = vadd.f32 %v358, %v395
  %397 = vmatmul.f32.gmra.mxu0 %v371
  %v398 = vpop.f32.mrf.mxu0
  %v399 = vadd.f32 %v358, %v398
  %400 = vdwg.mxu0
  %401 = vmatpush.msra.mxu0 0.0
  %402 = vmatpush.msra.mxu0 0.0
  %403 = vmatpush.msra.mxu0 0.0
  %404 = vmatpush.msra.mxu0 0.0
  %405 = vmatpush.msra.mxu0 0.0
  %406 = vmatpush.msra.mxu0 0.0
  %407 = vmatpush.msra.mxu0 0.0
  %408 = vmatpush.msra.mxu0 0.0
  %409 = vmatpush.msra.mxu0 0.0
  %410 = vmatpush.msra.mxu0 0.0
  %411 = vmatpush.msra.mxu0 0.0
  %412 = vmatpush.msra.mxu0 0.0
  %413 = vmatpush.msra.mxu0 0.0
  %414 = vmatpush.msra.mxu0 0.0
  %415 = vmatpush.msra.mxu0 0.0
  %416 = vmatpush.msra.mxu0 %v376
  %417 = vmatmul.f32.gmra.mxu0 %v368
  %v418 = vpop.f32.mrf.mxu0
  %v419 = vadd.f32 %v359, %v418
  %420 = vmatmul.f32.gmra.mxu0 %v371
  %v421 = vpop.f32.mrf.mxu0
  %v422 = vadd.f32 %v359, %v421
  %423 = vdwg.mxu0
  %v424 = vxor.u32 %v396, 2147483648
  %v425 = vxor.u32 %v419, 2147483648
  %v426 = vxor.u32 %v399, 2147483648
  %v427 = vxor.u32 %v422, 2147483648
  %v428 = vmul.f32 %v424, 1.442695
  %v429 = vpow.pop %v428
  %v430 = vmul.f32 %v425, 1.442695
  %v431 = vpow.pop %v430
  %v432 = vmul.f32 %v426, 1.442695
  %v433 = vpow.pop %v432
  %v434 = vmul.f32 %v427, 1.442695
  %v435 = vpow.pop %v434
  %v436 = vadd.f32 %v429, 1.0
  %v437 = vadd.f32 %v431, 1.0
  %v438 = vadd.f32 %v433, 1.0
  %v439 = vadd.f32 %v435, 1.0
  %v440 = vrcp.pop %v436
  %v441 = vmul.f32 %v436, %v440
  %v442 = vsub.f32 1.0, %v441
  %v443 = vmul.f32 %v440, %v442
  %v444 = vadd.f32 %v440, %v443
  %vm445 = vweird.f32 %v436
  %vm446 = vweird.f32 %v440
  %vm447 = vmor %vm445, %vm446
  %v448 = vsel %vm447, %v440, %v444
  %v449 = vand.u32 2147483647, %v436
  %vm450 = vcmp.eq.f32.partialorder %v449, 8.507059e+37
  %v451 = vand.u32 %v436, 2147483648
  %v452 = vor.u32 1.1754944e-38, %v451
  %v453 = vsel %vm450, %v452, %v448
  %v454 = vmul.f32 1.0, %v453
  %v455 = vrcp.pop %v437
  %v456 = vmul.f32 %v437, %v455
  %v457 = vsub.f32 1.0, %v456
  %v458 = vmul.f32 %v455, %v457
  %v459 = vadd.f32 %v455, %v458
  %vm460 = vweird.f32 %v437
  %vm461 = vweird.f32 %v455
  %vm462 = vmor %vm460, %vm461
  %v463 = vsel %vm462, %v455, %v459
  %v464 = vand.u32 2147483647, %v437
  %vm465 = vcmp.eq.f32.partialorder %v464, 8.507059e+37
  %v466 = vand.u32 %v437, 2147483648
  %v467 = vor.u32 1.1754944e-38, %v466
  %v468 = vsel %vm465, %v467, %v463
  %v469 = vmul.f32 1.0, %v468
  %v470 = vrcp.pop %v438
  %v471 = vmul.f32 %v438, %v470
  %v472 = vsub.f32 1.0, %v471
  %v473 = vmul.f32 %v470, %v472
  %v474 = vadd.f32 %v470, %v473
  %vm475 = vweird.f32 %v438
  %vm476 = vweird.f32 %v470
  %vm477 = vmor %vm475, %vm476
  %v478 = vsel %vm477, %v470, %v474
  %v479 = vand.u32 2147483647, %v438
  %vm480 = vcmp.eq.f32.partialorder %v479, 8.507059e+37
  %v481 = vand.u32 %v438, 2147483648
  %v482 = vor.u32 1.1754944e-38, %v481
  %v483 = vsel %vm480, %v482, %v478
  %v484 = vmul.f32 1.0, %v483
  %v485 = vrcp.pop %v439
  %v486 = vmul.f32 %v439, %v485
  %v487 = vsub.f32 1.0, %v486
  %v488 = vmul.f32 %v485, %v487
  %v489 = vadd.f32 %v485, %v488
  %vm490 = vweird.f32 %v439
  %vm491 = vweird.f32 %v485
  %vm492 = vmor %vm490, %vm491
  %v493 = vsel %vm492, %v485, %v489
  %v494 = vand.u32 2147483647, %v439
  %vm495 = vcmp.eq.f32.partialorder %v494, 8.507059e+37
  %v496 = vand.u32 %v439, 2147483648
  %v497 = vor.u32 1.1754944e-38, %v496
  %v498 = vsel %vm495, %v497, %v493
  %v499 = vmul.f32 1.0, %v498
  %v500 = vmul.f32 %v195, %v454
  %v501 = vmul.f32 %v209, %v469
  %v502 = vmul.f32 %v197, %v484
  %v503 = vmul.f32 %v211, %v499
  %v504 = vld [vmem:[%s9] sm:$0xff]
  %v505 = vld [vmem:[%s9 + $0x8] sm:$0xff]
  %v506 = vld [vmem:[%s9 + $0x10] sm:$0xff]
  %v507 = vld [vmem:[%s9 + $0x18] sm:$0xff]
  %v508 = vld [vmem:[%s9 + $0x20] sm:$0xff]
  %v509 = vld [vmem:[%s9 + $0x28] sm:$0xff]
  %v510 = vld [vmem:[%s9 + $0x30] sm:$0xff]
  %v511 = vld [vmem:[%s9 + $0x38] sm:$0xff]
  %v512 = vld [vmem:[%s9 + $0x40] sm:$0xff]
  %v513 = vld [vmem:[%s9 + $0x48] sm:$0xff]
  %v514 = vld [vmem:[%s9 + $0x50] sm:$0xff]
  %v515 = vld [vmem:[%s9 + $0x58] sm:$0xff]
  %v516 = vld [vmem:[%s9 + $0x60] sm:$0xff]
  %v517 = vld [vmem:[%s9 + $0x68] sm:$0xff]
  %v518 = vld [vmem:[%s9 + $0x70] sm:$0xff]
  %v519 = vld [vmem:[%s9 + $0x78] sm:$0xff]
  %v520 = vld [vmem:[%s9 + $0x80] sm:$0xff]
  %v521 = vld [vmem:[%s9 + $0x88] sm:$0xff]
  %v522 = vld [vmem:[%s9 + $0x90] sm:$0xff]
  %v523 = vld [vmem:[%s9 + $0x98] sm:$0xff]
  %v524 = vld [vmem:[%s9 + $0xa0] sm:$0xff]
  %v525 = vld [vmem:[%s9 + $0xa8] sm:$0xff]
  %v526 = vld [vmem:[%s9 + $0xb0] sm:$0xff]
  %v527 = vld [vmem:[%s9 + $0xb8] sm:$0xff]
  %v528 = vld [vmem:[%s9 + $0xc0] sm:$0xff]
  %v529 = vld [vmem:[%s9 + $0xc8] sm:$0xff]
  %v530 = vld [vmem:[%s9 + $0xd0] sm:$0xff]
  %v531 = vld [vmem:[%s9 + $0xd8] sm:$0xff]
  %v532 = vld [vmem:[%s9 + $0xe0] sm:$0xff]
  %v533 = vld [vmem:[%s9 + $0xe8] sm:$0xff]
  %v534 = vld [vmem:[%s9 + $0xf0] sm:$0xff]
  %v535 = vld [vmem:[%s9 + $0xf8] sm:$0xff]
  %v536 = vld [vmem:[%s10] sm:$0xff]
  %v537 = vsel %vm62, %v500, -inf
  %538 = vmax.xlane.f32.xlu0 %v537
  %v539 = vpop.xlane.xlu0 %538
  %v540 = vsel %vm62, %v502, -inf
  %541 = vmax.xlane.f32.xlu0 %v540
  %v542 = vpop.xlane.xlu0 %541
  %v543 = vperm.slane %v536, 0
  %v544 = vmul.f32 %v539, %v543
  %v545 = vmul.f32 %v542, %v543
  %546 = vmatpush.msra.mxu0 %v519
  %547 = vmatpush.msra.mxu0 %v518
  %548 = vmatpush.msra.mxu0 %v517
  %549 = vmatpush.msra.mxu0 %v516
  %550 = vmatpush.msra.mxu0 %v515
  %551 = vmatpush.msra.mxu0 %v514
  %552 = vmatpush.msra.mxu0 %v513
  %553 = vmatpush.msra.mxu0 %v512
  %554 = vmatpush.msra.mxu0 %v511
  %555 = vmatpush.msra.mxu0 %v510
  %556 = vmatpush.msra.mxu0 %v509
  %557 = vmatpush.msra.mxu0 %v508
  %558 = vmatpush.msra.mxu0 %v507
  %559 = vmatpush.msra.mxu0 %v506
  %560 = vmatpush.msra.mxu0 %v505
  %561 = vmatpush.msra.mxu0 %v504
  %562 = vmatmul.f32.gmra.mxu0 %v500
  %v563 = vpop.f32.mrf.mxu0
  %v564 = vadd.f32 %v544, %v563
  %565 = vmatmul.f32.gmra.mxu0 %v502
  %v566 = vpop.f32.mrf.mxu0
  %v567 = vadd.f32 %v545, %v566
  %568 = vdwg.mxu0
  %569 = vmatpush.msra.mxu0 %v535
  %570 = vmatpush.msra.mxu0 %v534
  %571 = vmatpush.msra.mxu0 %v533
  %572 = vmatpush.msra.mxu0 %v532
  %573 = vmatpush.msra.mxu0 %v531
  %574 = vmatpush.msra.mxu0 %v530
  %575 = vmatpush.msra.mxu0 %v529
  %576 = vmatpush.msra.mxu0 %v528
  %577 = vmatpush.msra.mxu0 %v527
  %578 = vmatpush.msra.mxu0 %v526
  %579 = vmatpush.msra.mxu0 %v525
  %580 = vmatpush.msra.mxu0 %v524
  %581 = vmatpush.msra.mxu0 %v523
  %582 = vmatpush.msra.mxu0 %v522
  %583 = vmatpush.msra.mxu0 %v521
  %584 = vmatpush.msra.mxu0 %v520
  %585 = vmatmul.f32.gmra.mxu0 %v501
  %v586 = vpop.f32.mrf.mxu0
  %v587 = vadd.f32 %v564, %v586
  %588 = vmatmul.f32.gmra.mxu0 %v503
  %v589 = vpop.f32.mrf.mxu0
  %v590 = vadd.f32 %v567, %v589
  %591 = vdwg.mxu0
  %vm592 = vcmask 523520
  %v593 = vsel %vm592, %v500, -inf
  %594 = vmax.xlane.f32.xlu0 %v593
  %v595 = vpop.xlane.xlu0 %594
  %v596 = vsel %vm592, %v502, -inf
  %597 = vmax.xlane.f32.xlu0 %v596
  %v598 = vpop.xlane.xlu0 %597
  %v599 = vperm.slane %v536, 1
  %v600 = vmul.f32 %v595, %v599
  %v601 = vmul.f32 %v598, %v599
  %v602 = vadd.f32 %v587, %v600
  %v603 = vadd.f32 %v590, %v601
  %vm604 = vcmask 785920
  %v605 = vsel %vm604, %v500, -inf
  %606 = vmax.xlane.f32.xlu0 %v605
  %v607 = vpop.xlane.xlu0 %606
  %v608 = vsel %vm604, %v502, -inf
  %609 = vmax.xlane.f32.xlu0 %v608
  %v610 = vpop.xlane.xlu0 %609
  %v611 = vperm.slane %v536, 2
  %v612 = vmul.f32 %v607, %v611
  %v613 = vmul.f32 %v610, %v611
  %v614 = vadd.f32 %v602, %v612
  %v615 = vadd.f32 %v603, %v613
  %vm616 = vcmask 1048320
  %v617 = vsel %vm616, %v500, -inf
  %618 = vmax.xlane.f32.xlu0 %v617
  %v619 = vpop.xlane.xlu0 %618
  %v620 = vsel %vm616, %v502, -inf
  %621 = vmax.xlane.f32.xlu0 %v620
  %v622 = vpop.xlane.xlu0 %621
  %v623 = vperm.slane %v536, 3
  %v624 = vmul.f32 %v619, %v623
  %v625 = vmul.f32 %v622, %v623
  %v626 = vadd.f32 %v614, %v624
  %v627 = vadd.f32 %v615, %v625
  %v628 = vsel %vm62, %v501, -inf
  %629 = vmax.xlane.f32.xlu0 %v628
  %v630 = vpop.xlane.xlu0 %629
  %v631 = vsel %vm62, %v503, -inf
  %632 = vmax.xlane.f32.xlu0 %v631
  %v633 = vpop.xlane.xlu0 %632
  %v634 = vperm.slane %v536, 4
  %v635 = vmul.f32 %v630, %v634
  %v636 = vmul.f32 %v633, %v634
  %v637 = vadd.f32 %v626, %v635
  %v638 = vadd.f32 %v627, %v636
  %v639 = vsel %vm592, %v501, -inf
  %640 = vmax.xlane.f32.xlu0 %v639
  %v641 = vpop.xlane.xlu0 %640
  %v642 = vsel %vm592, %v503, -inf
  %643 = vmax.xlane.f32.xlu0 %v642
  %v644 = vpop.xlane.xlu0 %643
  %v645 = vperm.slane %v536, 5
  %v646 = vmul.f32 %v641, %v645
  %v647 = vmul.f32 %v644, %v645
  %v648 = vadd.f32 %v637, %v646
  %v649 = vadd.f32 %v638, %v647
  %v650 = vsel %vm604, %v501, -inf
  %651 = vmax.xlane.f32.xlu0 %v650
  %v652 = vpop.xlane.xlu0 %651
  %v653 = vsel %vm604, %v503, -inf
  %654 = vmax.xlane.f32.xlu0 %v653
  %v655 = vpop.xlane.xlu0 %654
  %v656 = vperm.slane %v536, 6
  %v657 = vmul.f32 %v652, %v656
  %v658 = vmul.f32 %v655, %v656
  %v659 = vadd.f32 %v648, %v657
  %v660 = vadd.f32 %v649, %v658
  %v661 = vsel %vm616, %v501, -inf
  %662 = vmax.xlane.f32.xlu0 %v661
  %v663 = vpop.xlane.xlu0 %662
  %v664 = vsel %vm616, %v503, -inf
  %665 = vmax.xlane.f32.xlu0 %v664
  %v666 = vpop.xlane.xlu0 %665
  %v667 = vperm.slane %v536, 7
  %v668 = vmul.f32 %v663, %v667
  %v669 = vmul.f32 %v666, %v667
  %v670 = vadd.f32 %v659, %v668
  %v671 = vadd.f32 %v660, %v669
  %vm672 = vcmask 64512
  %673 = vst.msk [vmem:[%s11] sm:$0xff] %vm672, %v670
  %674 = vst.msk [vmem:[%s11 + $0x8] sm:$0xff] %vm672, %v671
  // Predicated region
  $region46: #{tpu_custom_call.1} parent=0 // pred_check
    _
  $region47: #{tpu_custom_call.1} parent=0 // pred_check_branch
    %676 = sbr.rel (0) target = $region49
  $region48: #{tpu_custom_call.1} parent=0 // pred_region
    _
  $region49: #{tpu_custom_call.1} parent=0 // pred_fallthru
    _
  // Predicated region
  $region50: #{tpu_custom_call.1} parent=0 // pred_check
    _
  $region51: #{tpu_custom_call.1} parent=0 // pred_check_branch
    %678 = sbr.rel (0) target = $region53
  $region52: #{tpu_custom_call.1} parent=0 // pred_region
    _
  $region53: #{tpu_custom_call.1} parent=0 // pred_fallthru
    _

</llo_original>
